<compile_context>
chip_gen: v7x
topology: tpu7x:2x2x1
jax: 0.10.0
libtpu: 0.0.40
codegen_flags: <defaults>
</compile_context>

<pallas_src>
import jax
import jax.numpy as jnp
from jax.experimental import pallas as pl
from jax.experimental.pallas import tpu as pltpu


def _make_attn_kernel(has_mask):
    def kernel(*refs):
        if has_mask:
            x_ref, hb_ref, w1t_ref, u_ref, bias_ref, out_ref, attn_ref = refs
        else:
            x_ref, hb_ref, w1t_ref, u_ref, out_ref, attn_ref = refs
            bias_ref = None

        # x_ref:    (Bt, S, H)  inputs block for Bt batch elements
        # hb_ref:   (Bt, 1, H)  precomputed  h_last @ W2^T + bW  (broadcasts over S)
        # w1t_ref:  (H, H)      W1^T (pre-transposed in the wrapper)
        # u_ref:    (1, H)      V_weight.sum(axis=0)
        # bias_ref: (Bt, S)     additive logit bias (0 / -1e9), only when has_mask
        # out_ref:  (Bt, S, H)  attention-weighted inputs
        # attn_ref: (Bt, S)     attention weights (lane-dense; reshaped outside)
        Bt, S, H = x_ref.shape
        x = x_ref[...]                                            # (Bt, S, H)

        # Single MXU matmul over all Bt*S rows, no in-kernel transpose.
        pre = jnp.dot(x.reshape(Bt * S, H), w1t_ref[...],
                      preferred_element_type=jnp.float32).reshape(Bt, S, H)
        a = jnp.tanh(pre + hb_ref[...])                           # (Bt, S, H)

        # V projection followed by channel sum == dot with u.  (summed V bias
        # dropped: constant logit shift, cancels in the softmax.)
        s = jnp.sum(a * u_ref[...], axis=-1)                      # (Bt, S) logits

        if has_mask:
            s = s + bias_ref[...]                                 # masked_fill(-1e9)

        # softmax over the sequence dimension, per batch row
        m = jnp.max(s, axis=-1, keepdims=True)
        p = jnp.exp(s - m)
        denom = jnp.sum(p, axis=-1, keepdims=True)
        attn = p * pl.reciprocal(denom, approx=True)              # (Bt, S)

        attn_ref[...] = attn
        out_ref[...] = attn[:, :, None] * x                       # (Bt, S, H)

    return kernel


def _pick_block_batch(B, S, H, budget_bytes=8 << 20):
    """Largest batch tile Bt that divides B, keeps the double-buffered x/out blocks
    under `budget_bytes`, and keeps the (Bt, S) attention block layout-friendly
    (Bt == B or Bt a multiple of 8)."""
    per_b = 4 * S * H * 4            # x block + out block, each double-buffered, f32
    cap = max(1, budget_bytes // max(per_b, 1))
    if B <= cap:
        return B
    cands = [d for d in range(1, B + 1) if B % d == 0 and d <= cap and d % 8 == 0]
    if cands:
        return max(cands)
    return B                          # fall back: one big grid step (still correct)


@jax.jit
def attn_forward(inputs, hidden_states, W_weight, W_bias, V_weight, V_bias,
                 mask=None):
    """inputs: (B, S, H) f32; hidden_states: (L, B, H) f32;
    mask: optional (B, S) int (0 == padding).
    Returns (x_out (B, S, H), x_attn (B, S, 1))."""
    B, S, H = inputs.shape

    # ---- wrapper-side algebra / hoisting (cheap, batched XLA ops) ----
    W1t = W_weight[:, :H].T                        # (H, H), acts on inputs
    W2 = W_weight[:, H:]                           # (H, H), acts on hidden state
    h_last = hidden_states[-1]                     # (B, H)
    hb = (h_last @ W2.T + W_bias)[:, None, :]      # (B, 1, H)  hidden proj + W bias
    u = V_weight.sum(axis=0)[None, :]              # (1, H)     collapsed V projection

    has_mask = mask is not None

    Bt = _pick_block_batch(B, S, H)
    grid = (B // Bt,)

    out_shape = (
        jax.ShapeDtypeStruct((B, S, H), jnp.float32),
        jax.ShapeDtypeStruct((B, S), jnp.float32),     # lane-dense attention weights
    )
    in_specs = [
        pl.BlockSpec((Bt, S, H), lambda i: (i, 0, 0)),   # inputs
        pl.BlockSpec((Bt, 1, H), lambda i: (i, 0, 0)),   # hb
        pl.BlockSpec((H, H),     lambda i: (0, 0)),      # W1^T (grid-invariant)
        pl.BlockSpec((1, H),     lambda i: (0, 0)),      # u    (grid-invariant)
    ]
    out_specs = (
        pl.BlockSpec((Bt, S, H), lambda i: (i, 0, 0)),
        pl.BlockSpec((Bt, S),    lambda i: (i, 0)),
    )

    operands = [inputs, hb, W1t, u]
    if has_mask:
        # masked_fill(mask == 0, -1e9) on the logits, precomputed as an additive bias.
        logit_bias = jnp.where(mask == 0, jnp.float32(-1e9), jnp.float32(0.0))
        in_specs.append(pl.BlockSpec((Bt, S), lambda i: (i, 0)))
        operands.append(logit_bias)

    x_out, attn2d = pl.pallas_call(
        _make_attn_kernel(has_mask),
        out_shape=out_shape,
        grid=grid,
        in_specs=in_specs,
        out_specs=out_specs,
        compiler_params=pltpu.CompilerParams(
            dimension_semantics=("parallel",)),
    )(*operands)

    return x_out, attn2d[:, :, None]                   # (B, S, H), (B, S, 1)


def _reference(inputs, hidden_states, W_weight, W_bias, V_weight, V_bias,
               mask=None):
    B, S, H = inputs.shape
    h = jnp.broadcast_to(hidden_states[-1][:, None, :], (B, S, H))
    concat = jnp.concatenate([inputs, h], axis=2)
    a = jnp.tanh(concat @ W_weight.T + W_bias)
    v = a @ V_weight.T + V_bias
    x_attn = jnp.sum(v, axis=2, keepdims=True)
    if mask is not None:
        x_attn = jnp.where(mask[:, :, None] == 0, jnp.float32(-1e9), x_attn)
    x_attn = jax.nn.softmax(x_attn, axis=1)
    return x_attn * inputs, x_attn


if __name__ == "__main__":
    B, S, H, L = 2, 8, 32, 2
    key = jax.random.PRNGKey(0)
    ks = jax.random.split(key, 6)

    inputs = jax.random.normal(ks[0], (B, S, H), dtype=jnp.float32)
    hidden_states = jax.random.normal(ks[1], (L, B, H), dtype=jnp.float32)

    # deterministic parameter init (PyTorch Linear-like uniform bounds)
    bound_W = 1.0 / jnp.sqrt(2.0 * H)
    bound_V = 1.0 / jnp.sqrt(1.0 * H)
    W_weight = jax.random.uniform(ks[2], (H, 2 * H), jnp.float32, -bound_W, bound_W)
    W_bias   = jax.random.uniform(ks[3], (H,),       jnp.float32, -bound_W, bound_W)
    V_weight = jax.random.uniform(ks[4], (H, H),     jnp.float32, -bound_V, bound_V)
    V_bias   = jax.random.uniform(ks[5], (H,),       jnp.float32, -bound_V, bound_V)

    # ---- mask=None path ----
    x_out, x_attn = attn_forward(inputs, hidden_states,
                                 W_weight, W_bias, V_weight, V_bias)
    jax.block_until_ready((x_out, x_attn))

    ref_out, ref_attn = _reference(inputs, hidden_states,
                                   W_weight, W_bias, V_weight, V_bias)
    assert x_out.shape == (B, S, H) and x_attn.shape == (B, S, 1)
    # tolerance loosened slightly for pl.reciprocal(approx=True) in the softmax
    assert jnp.allclose(x_out, ref_out, atol=2e-3, rtol=2e-3)
    assert jnp.allclose(x_attn, ref_attn, atol=2e-3, rtol=2e-3)

    # ---- masked path (padding on the second half of every sequence) ----
    mask = jnp.concatenate(
        [jnp.ones((B, S // 2), jnp.int32), jnp.zeros((B, S - S // 2), jnp.int32)],
        axis=1)
    mx_out, mx_attn = attn_forward(inputs, hidden_states,
                                   W_weight, W_bias, V_weight, V_bias, mask)
    jax.block_until_ready((mx_out, mx_attn))
    mref_out, mref_attn = _reference(inputs, hidden_states,
                                     W_weight, W_bias, V_weight, V_bias, mask)
    assert jnp.allclose(mx_out, mref_out, atol=2e-3, rtol=2e-3)
    assert jnp.allclose(mx_attn, mref_attn, atol=2e-3, rtol=2e-3)

    print("KERNEL_OK")
</pallas_src>

<mosaic_0001>
module attributes {stable_mosaic.version = 11 : i64} {
  func.func @kernel(%arg0: i32, %arg1: memref<2x8x32xf32, #tpu.memory_space<vmem>>, %arg2: memref<2x1x32xf32, #tpu.memory_space<vmem>>, %arg3: memref<32x32xf32, #tpu.memory_space<vmem>>, %arg4: memref<1x32xf32, #tpu.memory_space<vmem>>, %arg5: memref<2x8x32xf32, #tpu.memory_space<vmem>>, %arg6: memref<2x8xf32, #tpu.memory_space<vmem>>) attributes {dimension_semantics = [#tpu.dimension_semantics<parallel>], iteration_bounds = array<i64: 1>, scalar_prefetch = 0 : i64, scratch_operands = 0 : i64, tpu.core_type = #tpu.core_type<tc>, window_params = [{transform_indices = @transform_0, window_bounds = array<i64: 2, 8, 32>}, {transform_indices = @transform_1, window_bounds = array<i64: 2, 1, 32>}, {pipeline_mode = #tpu.pipeline_mode<synchronous>, transform_indices = @transform_2, window_bounds = array<i64: 32, 32>}, {pipeline_mode = #tpu.pipeline_mode<synchronous>, transform_indices = @transform_3, window_bounds = array<i64: 1, 32>}, {transform_indices = @transform_4, window_bounds = array<i64: 2, 8, 32>}, {transform_indices = @transform_5, window_bounds = array<i64: 2, 8>}]} {
    %c0 = arith.constant 0 : index
    %c0_0 = arith.constant 0 : index
    %c0_1 = arith.constant 0 : index
    %0 = vector.load %arg1[%c0, %c0_0, %c0_1] : memref<2x8x32xf32, #tpu.memory_space<vmem>>, vector<2x8x32xf32>
    %1 = vector.shape_cast %0 : vector<2x8x32xf32> to vector<16x32xf32>
    %c0_2 = arith.constant 0 : index
    %c0_3 = arith.constant 0 : index
    %2 = vector.load %arg3[%c0_2, %c0_3] : memref<32x32xf32, #tpu.memory_space<vmem>>, vector<32x32xf32>
    %cst = arith.constant dense<0.000000e+00> : vector<16x32xf32>
    %3 = tpu.matmul %1, %2, %cst {dimension_numbers = #tpu.dot_dimension_numbers<[1], [0], [0], [1], [0, 0, 1, 1], [], []>} : vector<16x32xf32>, vector<32x32xf32>, vector<16x32xf32> -> vector<16x32xf32>
    %4 = vector.shape_cast %3 : vector<16x32xf32> to vector<2x8x32xf32>
    %c0_4 = arith.constant 0 : index
    %c0_5 = arith.constant 0 : index
    %c0_6 = arith.constant 0 : index
    %5 = vector.load %arg2[%c0_4, %c0_5, %c0_6] : memref<2x1x32xf32, #tpu.memory_space<vmem>>, vector<2x1x32xf32>
    %6 = vector.broadcast %5 : vector<2x1x32xf32> to vector<2x8x32xf32>
    %7 = arith.addf %4, %6 : vector<2x8x32xf32>
    %8 = math.tanh %7 : vector<2x8x32xf32>
    %c0_7 = arith.constant 0 : index
    %c0_8 = arith.constant 0 : index
    %9 = vector.load %arg4[%c0_7, %c0_8] : memref<1x32xf32, #tpu.memory_space<vmem>>, vector<1x32xf32>
    %10 = vector.shape_cast %9 : vector<1x32xf32> to vector<1x1x32xf32>
    %11 = vector.broadcast %10 : vector<1x1x32xf32> to vector<2x8x32xf32>
    %12 = arith.mulf %8, %11 : vector<2x8x32xf32>
    %cst_9 = arith.constant dense<0.000000e+00> : vector<2x8xf32>
    %13 = vector.multi_reduction <add>, %12, %cst_9 [2] : vector<2x8x32xf32> to vector<2x8xf32>
    %cst_10 = arith.constant dense<0xFF800000> : vector<2xf32>
    %14 = vector.multi_reduction <maximumf>, %13, %cst_10 [1] : vector<2x8xf32> to vector<2xf32>
    %15 = vector.shape_cast %14 : vector<2xf32> to vector<2x1xf32>
    %16 = vector.broadcast %15 : vector<2x1xf32> to vector<2x8xf32>
    %17 = arith.subf %13, %16 : vector<2x8xf32>
    %18 = math.exp %17 : vector<2x8xf32>
    %cst_11 = arith.constant dense<0.000000e+00> : vector<2xf32>
    %19 = vector.multi_reduction <add>, %18, %cst_11 [1] : vector<2x8xf32> to vector<2xf32>
    %20 = vector.shape_cast %19 : vector<2xf32> to vector<2x1xf32>
    %21 = tpu.reciprocal %20 {approx = true} : vector<2x1xf32> -> vector<2x1xf32>
    %22 = vector.broadcast %21 : vector<2x1xf32> to vector<2x8xf32>
    %23 = arith.mulf %18, %22 : vector<2x8xf32>
    %c0_12 = arith.constant 0 : index
    %c0_13 = arith.constant 0 : index
    %24 = vector.load %arg6[%c0_12, %c0_13] : memref<2x8xf32, #tpu.memory_space<vmem>>, vector<2x8xf32>
    tpu.vector_store %arg6[%c0_12, %c0_13], %23 {strides = array<i32>} : memref<2x8xf32, #tpu.memory_space<vmem>>, vector<2x8xf32>,
    %25 = vector.shape_cast %23 : vector<2x8xf32> to vector<2x8x1xf32>
    %26 = vector.broadcast %25 : vector<2x8x1xf32> to vector<2x8x32xf32>
    %27 = arith.mulf %26, %0 : vector<2x8x32xf32>
    %c0_14 = arith.constant 0 : index
    %c0_15 = arith.constant 0 : index
    %c0_16 = arith.constant 0 : index
    %28 = vector.load %arg5[%c0_14, %c0_15, %c0_16] : memref<2x8x32xf32, #tpu.memory_space<vmem>>, vector<2x8x32xf32>
    tpu.vector_store %arg5[%c0_14, %c0_15, %c0_16], %27 {strides = array<i32>} : memref<2x8x32xf32, #tpu.memory_space<vmem>>, vector<2x8x32xf32>,
    return
  }
  func.func @transform_0(%arg0: i32) -> (i32, i32, i32) {
    %c0_i32 = arith.constant 0 : i32
    %c0_i32_0 = arith.constant 0 : i32
    %c0_i32_1 = arith.constant 0 : i32
    return %arg0, %c0_i32, %c0_i32_0 : i32, i32, i32
  }
  func.func @transform_1(%arg0: i32) -> (i32, i32, i32) {
    %c0_i32 = arith.constant 0 : i32
    %c0_i32_0 = arith.constant 0 : i32
    %c0_i32_1 = arith.constant 0 : i32
    return %arg0, %c0_i32, %c0_i32_0 : i32, i32, i32
  }
  func.func @transform_2(%arg0: i32) -> (i32, i32) {
    %c0_i32 = arith.constant 0 : i32
    %c0_i32_0 = arith.constant 0 : i32
    %c0_i32_1 = arith.constant 0 : i32
    return %c0_i32, %c0_i32_0 : i32, i32
  }
  func.func @transform_3(%arg0: i32) -> (i32, i32) {
    %c0_i32 = arith.constant 0 : i32
    %c0_i32_0 = arith.constant 0 : i32
    %c0_i32_1 = arith.constant 0 : i32
    return %c0_i32, %c0_i32_0 : i32, i32
  }
  func.func @transform_4(%arg0: i32) -> (i32, i32, i32) {
    %c0_i32 = arith.constant 0 : i32
    %c0_i32_0 = arith.constant 0 : i32
    %c0_i32_1 = arith.constant 0 : i32
    return %arg0, %c0_i32, %c0_i32_0 : i32, i32, i32
  }
  func.func @transform_5(%arg0: i32) -> (i32, i32) {
    %c0_i32 = arith.constant 0 : i32
    %c0_i32_0 = arith.constant 0 : i32
    return %arg0, %c0_i32 : i32, i32
  }
}

</mosaic_0001>

<llo_original>
// kernel: attn_forward.1
$region0: #{attn_forward.1}
  #allocation0 [shape = 'u32[]', space=smem, size = 0x4, offset = 0x4, fixed_abs, tag = 'smem constant byte address 0x4 - core index']
  #allocation1 [shape = 'u32[144,128]{1,0:T(1,128)}', space=vmem, size = 0x12000, scoped, tag = 'internal scratch']
  %s0 = inlined_call_operand.vmem [shape: f32[2,8,32], index: 0, kind: input, shape index: {}]
  %s1 = inlined_call_operand.vmem [shape: f32[2,1,32], index: 1, kind: input, shape index: {}]
  %s2 = inlined_call_operand.vmem [shape: f32[32,32], index: 2, kind: input, shape index: {}]
  %s3 = inlined_call_operand.vmem [shape: f32[1,32], index: 3, kind: input, shape index: {}]
  %s4 = inlined_call_operand.hbm [shape: f32[2,8,32], index: 4, kind: output, shape index: {0}]
  %s5 = inlined_call_operand.hbm [shape: f32[2,8], index: 5, kind: output, shape index: {1}]
  %6 = xla_tuple %s4, %s5
  %s7 = sld [smem:[#allocation0]]
  $region34: #{attn_forward.1} parent=0
    _
  %s9 = ssub.s32 1, %s7
  %s10 = scalar_select 0, %s9, %s7
  $region1: #{attn_forward.1} parent=0
    #allocation2 [shape = 'u8[8192]{0}', space=vmem, size = 0x2000, scoped, tag = 'output window, operand 0, single buffered']
    #allocation3 [shape = 's32[1]{0}', space=sflag, size = 0x4, scoped, tag = 'scoped memory for attn_forward.1']
    #allocation4 [shape = 'u8[1024]{0}', space=vmem, size = 0x400, scoped, tag = 'output window, operand 1, single buffered']
    #allocation5 [shape = 's32[1]{0}', space=sflag, size = 0x4, scoped, tag = 'scoped memory for attn_forward.1']
    %11 = vsyncpa [#allocation3], 0
    %12 = vsyncpa [#allocation5], 0
    // Predicated region
    $region2: #{attn_forward.1} parent=1 // pred_check
      _
    $region3: #{attn_forward.1} parent=1 // pred_check_branch
      %14 = sbr.rel (0) target = $region5
    $region4: #{attn_forward.1} parent=1 // pred_region
      _
    $region5: #{attn_forward.1} parent=1 // pred_fallthru
      _
    // Predicated region
    $region6: #{attn_forward.1} parent=1 // pred_check
      _
    $region7: #{attn_forward.1} parent=1 // pred_check_branch
      %16 = sbr.rel (0) target = $region9
    $region8: #{attn_forward.1} parent=1 // pred_region
      _
    $region9: #{attn_forward.1} parent=1 // pred_fallthru
      _
    // Predicated region
    $region10: #{attn_forward.1} parent=1 // pred_check
      _
    $region11: #{attn_forward.1} parent=1 // pred_check_branch
      %18 = sbr.rel (0) target = $region13
    $region12: #{attn_forward.1} parent=1 // pred_region
      _
    $region13: #{attn_forward.1} parent=1 // pred_fallthru
      _
    // Predicated region
    $region14: #{attn_forward.1} parent=1 // pred_check
      _
    $region15: #{attn_forward.1} parent=1 // pred_check_branch
      %20 = sbr.rel (0) target = $region17
    $region16: #{attn_forward.1} parent=1 // pred_region
      _
    $region17: #{attn_forward.1} parent=1 // pred_fallthru
      _
    %v21 = vld [vmem:[%s0] sm:$0xff]
    %v22 = vld [vmem:[%s0 + $0x8] sm:$0xff]
    %v23 = vld [vmem:[%s2] sm:$0xff]
    %v24 = vld [vmem:[%s2 + $0x8] sm:$0xff]
    %v25 = vld [vmem:[%s2 + $0x10] sm:$0xff]
    %v26 = vld [vmem:[%s2 + $0x18] sm:$0xff]
    %vm27 = vcmask 261120
    %v29 = vsel %vm27, %v21, 0
    %v32 = vsel %vm27, %v22, 0
    %34 = vmatprep.subr.mxu0 0.0
    %35 = vmatpush1.msra.mxu0 %v23
    %36 = vmatprep.subr.mxu0 0.0
    %37 = vmatpush1.msra.mxu0 %v24
    %38 = vmatprep.subr.mxu0 0.0
    %39 = vmatpush1.msra.mxu0 %v25
    %40 = vmatprep.subr.mxu0 0.0
    %41 = vmatpush1.msra.mxu0 %v26
    %42 = vmatprep.subr.mxu0 0.0
    %43 = vmatpush1.msra.mxu0 0.0
    %44 = vmatprep.subr.mxu0 0.0
    %45 = vmatpush1.msra.mxu0 0.0
    %46 = vmatprep.subr.mxu0 0.0
    %47 = vmatpush1.msra.mxu0 0.0
    %48 = vmatprep.subr.mxu0 0.0
    %49 = vmatpush1.msra.mxu0 0.0
    %50 = vmatprep.subr.mxu0 0.0
    %51 = vmatpush1.msra.mxu0 0.0
    %52 = vmatprep.subr.mxu0 0.0
    %53 = vmatpush1.msra.mxu0 0.0
    %54 = vmatprep.subr.mxu0 0.0
    %55 = vmatpush1.msra.mxu0 0.0
    %56 = vmatprep.subr.mxu0 0.0
    %57 = vmatpush1.msra.mxu0 0.0
    %58 = vmatprep.subr.mxu0 0.0
    %59 = vmatpush1.msra.mxu0 0.0
    %60 = vmatprep.subr.mxu0 0.0
    %61 = vmatpush1.msra.mxu0 0.0
    %62 = vmatprep.subr.mxu0 0.0
    %63 = vmatpush1.msra.mxu0 0.0
    %64 = vmatprep.subr.mxu0 0.0
    %65 = vmatpush1.msra.mxu0 0.0
    %66 = vmatprep.subr.mxu0 0.0
    %67 = vmatpush1.msra.mxu0 0.0
    %68 = vmatprep.subr.mxu0 0.0
    %69 = vmatpush1.msra.mxu0 0.0
    %70 = vmatprep.subr.mxu0 0.0
    %71 = vmatpush1.msra.mxu0 0.0
    %72 = vmatprep.subr.mxu0 0.0
    %73 = vmatpush1.msra.mxu0 0.0
    %74 = vmatprep.subr.mxu0 0.0
    %75 = vmatpush1.msra.mxu0 0.0
    %76 = vmatprep.subr.mxu0 0.0
    %77 = vmatpush1.msra.mxu0 0.0
    %78 = vmatprep.subr.mxu0 0.0
    %79 = vmatpush1.msra.mxu0 0.0
    %80 = vmatprep.subr.mxu0 0.0
    %81 = vmatpush1.msra.mxu0 0.0
    %82 = vmatprep.subr.mxu0 0.0
    %83 = vmatpush1.msra.mxu0 0.0
    %84 = vmatprep.subr.mxu0 0.0
    %85 = vmatpush1.msra.mxu0 0.0
    %86 = vmatprep.subr.mxu0 0.0
    %87 = vmatpush1.msra.mxu0 0.0
    %88 = vmatprep.subr.mxu0 0.0
    %89 = vmatpush1.msra.mxu0 0.0
    %90 = vmatprep.subr.mxu0 0.0
    %91 = vmatpush1.msra.mxu0 0.0
    %92 = vmatprep.subr.mxu0 0.0
    %93 = vmatpush1.msra.mxu0 0.0
    %94 = vmatprep.subr.mxu0 0.0
    %95 = vmatpush1.msra.mxu0 0.0
    %96 = vmatprep.subr.mxu0 0.0
    %97 = vmatpush1.msra.mxu0 0.0
    %98 = vmatprep.mubr.f32.mxu0 0.0
    %99 = vmatmul.mubr.f32.gmra.mrb[0].mxu0 %v29
    %v100 = vpop.f32.mrb[0].mxu0
    %v101 = vadd.f32 0.0, %v100
    %v102 = vpop.f32.mrb[0].mxu0
    %103 = vmatprep.mubr.f32.mxu0 0.0
    %104 = vmatmul.mubr.f32.gmra.mrb[0].mxu0 %v32
    %v105 = vpop.f32.mrb[0].mxu0
    %v106 = vadd.f32 0.0, %v105
    %v107 = vpop.f32.mrb[0].mxu0
    %108 = vdwg.mxu0
    %v109 = vld [vmem:[%s1] sm:$0x1]
    %v110 = vld [vmem:[%s1 + $0x1] sm:$0x1]
    %v113 = vlaneseq
    %v114 = vshrl.u32 %v113, 7
    %v115 = vsub.s32 0, %v114
    %v116 = vrot.slane %v109, %v115
    %v117 = vlaneseq
    %v118 = vshrl.u32 %v117, 7
    %v119 = vsub.s32 0, %v118
    %v120 = vrot.slane %v110, %v119
    %v123 = vadd.f32 %v101, %v116
    %v124 = vadd.f32 %v106, %v120
    %v125 = vtanh.pop %v123
    %v126 = vtanh.pop %v124
    %v127 = vld [vmem:[%s3] sm:$0x1]
    %v129 = vlaneseq
    %v130 = vshrl.u32 %v129, 7
    %v131 = vsub.s32 0, %v130
    %v132 = vrot.slane %v127, %v131
    %v134 = vmul.f32 %v125, %v132
    %v135 = vmul.f32 %v126, %v132
    %v136 = vsel %vm27, %v134, 0.0
    %137 = vadd.xlane.f32.xlu0 %v136
    %v138 = vpop.xlane.xlu0 %137
    %v139 = vsel %vm27, %v135, 0.0
    %140 = vadd.xlane.f32.xlu0 %v139
    %v141 = vpop.xlane.xlu0 %140
    %v144 = vlaneseq
    %v145 = vand.u32 %v144, 127
    %v146 = vlaneseq
    %v147 = vshrl.u32 %v146, 7
    %v148 = vsub.s32 %v145, %v147
    %v149 = vrot.slane %v138, %v148
    %v150 = vlaneseq
    %v151 = vshrl.u32 %v150, 7
    %v152 = vsub.s32 %v145, %v151
    %v153 = vrot.slane %v141, %v152
    %vm154 = vcmask 1041409
    %v155 = vsel %vm154, %v153, %v149
    %vm157 = vcmask 58368
    %v158 = vsel %vm157, %v155, -inf
    %159 = vmax.xlane.f32.xlu0 %v158
    %v160 = vpop.xlane.xlu0 %159
    %v162 = vlaneseq
    %v163 = vshrl.u32 %v162, 7
    %v164 = vsub.s32 0, %v163
    %v165 = vrot.slane %v160, %v164
    %v166 = vlaneseq
    %v167 = vshrl.u32 %v166, 7
    %v168 = vsub.s32 1, %v167
    %v169 = vrot.slane %v160, %v168
    %v172 = vsub.f32 %v138, %v165
    %v173 = vsub.f32 %v141, %v169
    %v174 = vmul.f32 %v172, 1.442695
    %v175 = vpow.pop %v174
    %v176 = vmul.f32 %v173, 1.442695
    %v177 = vpow.pop %v176
    %180 = vset.pattern.permute.xlu0 0
    %181 = vperm.xlu0 %180, %v175
    %v182 = vpop.permute.xlu0 %181
    %183 = vset.pattern.permute.xlu0 0
    %184 = vperm.xlu0 %183, %v177
    %v185 = vpop.permute.xlu0 %184
    %v186 = vlaneseq
    %v187 = vshrl.u32 %v186, 7
    %v188 = vsub.s32 %v145, %v187
    %v189 = vrot.slane %v182, %v188
    %v190 = vlaneseq
    %v191 = vshrl.u32 %v190, 7
    %v192 = vsub.s32 %v145, %v191
    %v193 = vrot.slane %v185, %v192
    %v194 = vsel %vm154, %v193, %v189
    %v196 = vsel %vm157, %v194, 0.0
    %197 = vadd.xlane.f32.xlu0 %v196
    %v198 = vpop.xlane.xlu0 %197
    %v199 = vrcp.pop %v198
    %v201 = vlaneseq
    %v202 = vshrl.u32 %v201, 7
    %v203 = vsub.s32 0, %v202
    %v204 = vrot.slane %v199, %v203
    %v205 = vlaneseq
    %v206 = vshrl.u32 %v205, 7
    %v207 = vsub.s32 1, %v206
    %v208 = vrot.slane %v199, %v207
    %v211 = vmul.f32 %v175, %v204
    %v212 = vmul.f32 %v177, %v208
    %215 = vset.pattern.permute.xlu0 0
    %216 = vperm.xlu0 %215, %v211
    %v217 = vpop.permute.xlu0 %216
    %218 = vset.pattern.permute.xlu0 0
    %219 = vperm.xlu0 %218, %v212
    %v220 = vpop.permute.xlu0 %219
    %v221 = vlaneseq
    %v222 = vshrl.u32 %v221, 7
    %v223 = vsub.s32 %v145, %v222
    %v224 = vrot.slane %v217, %v223
    %v225 = vlaneseq
    %v226 = vshrl.u32 %v225, 7
    %v227 = vsub.s32 %v145, %v226
    %v228 = vrot.slane %v220, %v227
    %v229 = vsel %vm154, %v228, %v224
    %231 = vst.msk [vmem:[#allocation4] sm:$0x3] %vm157, %v229
    %v234 = vmul.f32 %v217, %v21
    %v235 = vmul.f32 %v220, %v22
    %236 = vst.msk [vmem:[#allocation2] sm:$0xff] %vm27, %v234
    %237 = vst.msk [vmem:[#allocation2 + $0x8] sm:$0xff] %vm27, %v235
    // Predicated region
    $region18: #{attn_forward.1} parent=1 // pred_check
      _
    $region19: #{attn_forward.1} parent=1 // pred_check_branch
      %239 = sbr.rel (0) target = $region21
    $region20: #{attn_forward.1} parent=1 // pred_region
      %s241 = ssub.s32 256, 256
      %242 = vsyncadd [#allocation3], %s241
      %s243 = sshll.u32 [#allocation2], 4
      %s244 = int_to_ptr.vmem [resolvable:$true] %s243
      %249 = dma.vmem_to_hbm [thread:$0]  %s244, 256, %s4, [#allocation3], 128, 128, 8
    $region21: #{attn_forward.1} parent=1 // pred_fallthru
      _
    // Predicated region
    $region22: #{attn_forward.1} parent=1 // pred_check
      _
    $region23: #{attn_forward.1} parent=1 // pred_check_branch
      %251 = sbr.rel (0) target = $region25
    $region24: #{attn_forward.1} parent=1 // pred_region
      %s253 = ssub.s32 32, 32
      %254 = vsyncadd [#allocation5], %s253
      %s256 = sshll.u32 [#allocation4], 4
      %s257 = int_to_ptr.vmem [resolvable:$true] %s256
      %259 = dma.vmem_to_hbm [thread:$0]  %s257, 32, %s5, [#allocation5]
    $region25: #{attn_forward.1} parent=1 // pred_fallthru
      _
    // Predicated region
    $region26: #{attn_forward.1} parent=1 // pred_check
      _
    $region27: #{attn_forward.1} parent=1 // pred_check_branch
      %261 = sbr.rel (0) target = $region29
    $region28: #{attn_forward.1} parent=1 // pred_region
      %262 = dma.done [#allocation3], 256
    $region29: #{attn_forward.1} parent=1 // pred_fallthru
      _
    // Predicated region
    $region30: #{attn_forward.1} parent=1 // pred_check
      _
    $region31: #{attn_forward.1} parent=1 // pred_check_branch
      %264 = sbr.rel (0) target = $region33
    $region32: #{attn_forward.1} parent=1 // pred_region
      %265 = dma.done [#allocation5], 32
    $region33: #{attn_forward.1} parent=1 // pred_fallthru
      _
    %266 = vsyncpa [#allocation3], 1
    %267 = vsyncpa [#allocation5], 1

</llo_original>
